<compile_context>
chip_gen: v7x
topology: tpu7x:2x2x1
jax: 0.10.0
libtpu: 0.0.40
codegen_flags: <defaults>
</compile_context>

<pallas_src>
import functools

import jax
import jax.numpy as jnp
from jax import lax
from jax.experimental import pallas as pl
from jax.experimental.pallas import tpu as pltpu

_LANE = 128
_MAX_TILE_B = 512           # rows per batch tile for very large batches
_MEGACORE_TILE_B = 256      # cap when B <= 1024 so v7x's 2 TCs both get steps
_VMEM_DATA_BUDGET = 24 * 1024 * 1024   # conservative across v5e/v6e/v7x
_VMEM_LIMIT_BYTES = 32 * 1024 * 1024


def _round_up(x, m):
    return -(-x // m) * m


def _encode_kernel(x_ref, w_ref, b_ref, out_ref, acc_ref):
    # Grid: (batch tiles ["parallel"], K tiles ["arbitrary" reduction]).
    # x_ref:   (TB, TK)    flattened task reprs tile, input dtype
    # w_ref:   (TK, OUTP)  f32 fused weight: softmax(task_weight) (x) pooler_w.T
    # b_ref:   (1, OUTP)   f32 pooler bias (zero-padded lanes)
    # out_ref: (TB, OUTP)  L2-normalized embeddings, input dtype
    # acc_ref: (TB, OUTP)  f32 accumulator scratch
    k = pl.program_id(1)

    @pl.when(k == 0)
    def _():
        acc_ref[...] = jnp.zeros_like(acc_ref)

    acc_ref[...] += jnp.dot(x_ref[...].astype(jnp.float32), w_ref[...],
                            preferred_element_type=jnp.float32)

    @pl.when(k == pl.num_programs(1) - 1)
    def _():
        pooled = acc_ref[...] + b_ref[...]
        # F.normalize(dim=-1): x / max(||x||, 1e-12) == x * rsqrt(max(sumsq, 1e-24))
        sumsq = jnp.sum(pooled * pooled, axis=-1, keepdims=True)
        out_ref[...] = (pooled * lax.rsqrt(jnp.maximum(sumsq, 1e-24))
                        ).astype(out_ref.dtype)


def _fused_params(weight, pooler_w, pooler_b):
    """Fold softmax(task weight) into the pooler: W_eff (T*H, OUTP), bias (1, OUTP).

    Both stay f32: the bandwidth win comes from the big activations, not the
    tiny weight, and f32 keeps the task-mix/pooler precision of the reference.
    """
    T = weight.shape[0]
    OUT, H = pooler_w.shape
    w = jax.nn.softmax(weight.astype(jnp.float32))                     # (T,)
    pw_t = jnp.transpose(pooler_w.astype(jnp.float32))                 # (H, OUT)
    w_eff = (w[:, None, None] * pw_t[None, :, :]).reshape(T * H, OUT)  # (T*H, OUT)

    OUTP = _round_up(max(OUT, _LANE), _LANE)   # lane-dense output slab
    if OUTP != OUT:                            # pad lanes stay zero -> norm unchanged
        w_eff = jnp.pad(w_eff, ((0, 0), (0, OUTP - OUT)))
        bias = jnp.pad(pooler_b.astype(jnp.float32), (0, OUTP - OUT))
    else:                                      # OUT already lane-aligned: no pad
        bias = pooler_b.astype(jnp.float32)
    return w_eff, bias.reshape(1, OUTP)


def _choose_tiling(B, K, OUTP, x_itemsize):
    """VMEM-, megacore- and dtype-aware (tile_b, tile_k) selection."""
    sublane = max(8, 32 // x_itemsize)         # f32: 8, bf16: 16, int8/fp8: 32

    def vmem_bytes(tb, tk):
        w_bufs = (1 if tk == K else 2) * tk * OUTP * 4   # W_eff (single if invariant)
        return (2 * tb * tk * x_itemsize                 # x, double-buffered
                + w_bufs
                + OUTP * 4                               # bias (single-buffered)
                + 2 * tb * OUTP * x_itemsize             # out, double-buffered
                + tb * OUTP * 4)                         # f32 accumulator scratch

    cap = _MAX_TILE_B if B > 2 * _MAX_TILE_B else _MEGACORE_TILE_B
    if B <= cap:
        tile_b = B                             # single tile: exact batch, no pad
    else:
        n_b = pl.cdiv(B, cap)                  # minimize ragged waste, >= 2 steps
        tile_b = _round_up(pl.cdiv(B, n_b), sublane)

    tile_k = K
    if vmem_bytes(tile_b, tile_k) > _VMEM_DATA_BUDGET:
        # Split the contraction dim (128-aligned divisors of K) before shrinking
        # the batch tile below the HBM-roofline plateau.
        for tk in range((K // _LANE) * _LANE, 0, -_LANE):
            if K % tk == 0 and vmem_bytes(tile_b, tk) <= _VMEM_DATA_BUDGET:
                tile_k = tk
                break
        else:
            while tile_b > sublane and vmem_bytes(tile_b, tile_k) > _VMEM_DATA_BUDGET:
                tile_b = _round_up(tile_b // 2, sublane)
    return tile_b, tile_k


@functools.partial(jax.jit,
                   static_argnames=("tile_b", "tile_k", "single_buffer_w"))
def _encode_jit(task_reprs, weight, pooler_w, pooler_b, *,
                tile_b, tile_k, single_buffer_w):
    B, T, H = task_reprs.shape
    OUT = pooler_w.shape[0]
    K = T * H
    x_flat = task_reprs.reshape(B, K)          # contiguous merge (no extra HBM pass)
    w_eff, bias = _fused_params(weight, pooler_w, pooler_b)
    OUTP = w_eff.shape[1]

    n_b = pl.cdiv(B, tile_b)
    n_k = K // tile_k
    itemsize = jnp.dtype(x_flat.dtype).itemsize

    cost = pl.CostEstimate(
        flops=2 * n_b * tile_b * K * OUTP,
        transcendentals=n_b * tile_b,          # one rsqrt per row
        bytes_accessed=(n_b * tile_b * K * itemsize
                        + K * OUTP * 4 + OUTP * 4
                        + n_b * tile_b * OUTP * itemsize))

    out = pl.pallas_call(
        _encode_kernel,
        out_shape=jax.ShapeDtypeStruct((B, OUTP), x_flat.dtype),
        grid_spec=pltpu.PrefetchScalarGridSpec(
            num_scalar_prefetch=0,
            grid=(n_b, n_k),
            in_specs=[
                pl.BlockSpec((tile_b, tile_k), lambda i, k: (i, k)),
                pl.BlockSpec((tile_k, OUTP), lambda i, k: (k, 0),
                             pipeline_mode=(pl.Buffered(1) if single_buffer_w
                                            else None)),
                pl.BlockSpec((1, OUTP), lambda i, k: (0, 0),
                             pipeline_mode=pl.Buffered(1)),
            ],
            out_specs=pl.BlockSpec((tile_b, OUTP), lambda i, k: (i, 0)),
            scratch_shapes=[pltpu.VMEM((tile_b, OUTP), jnp.float32)],
        ),
        compiler_params=pltpu.CompilerParams(
            dimension_semantics=("parallel", "arbitrary"),
            vmem_limit_bytes=_VMEM_LIMIT_BYTES),
        cost_estimate=cost,
    )(x_flat, w_eff, bias)

    return out if OUTP == OUT else out[:, :OUT]


def encode(task_reprs, weight, pooler_w, pooler_b, *, _force_tile_k=None):
    """_encode for one tower.

    task_reprs: (B, T, H) pooled encoder outputs.  Keep them in the encoder's
    native dtype (bf16 recommended) -- do NOT up-cast here; the kernel
    accumulates in f32.  pooler_w: (OUT, H) torch nn.Linear layout; pooler_b: (OUT,).
    """
    B, T, H = task_reprs.shape
    OUT = pooler_w.shape[0]
    K = T * H
    OUTP = _round_up(max(OUT, _LANE), _LANE)
    tile_b, tile_k = _choose_tiling(B, K, OUTP, jnp.dtype(task_reprs.dtype).itemsize)
    if _force_tile_k is not None:              # test hook for the K-split path
        assert K % _force_tile_k == 0 and _force_tile_k % _LANE == 0
        tile_k = _force_tile_k
    return _encode_jit(task_reprs, weight, pooler_w, pooler_b,
                       tile_b=tile_b, tile_k=tile_k,
                       single_buffer_w=(tile_k == K))


def biencoder_forward(query_task_reprs, passage_task_reprs,
                      weight, pooler_w, pooler_b):
    """BiencoderModelForInference.forward: returns (q_reps, p_reps).

    Two independent pallas_calls (no concatenate): the op is HBM-read bound and
    a wrapper concat would add a full read+write pass over both towers; the
    small fused pooler weight is simply loaded twice instead.
    """
    q_reps = (None if query_task_reprs is None
              else encode(query_task_reprs, weight, pooler_w, pooler_b))
    p_reps = (None if passage_task_reprs is None
              else encode(passage_task_reprs, weight, pooler_w, pooler_b))
    return q_reps, p_reps


def _reference_encode(task_reprs, weight, pooler_w, pooler_b):
    w = jax.nn.softmax(weight.astype(jnp.float32))                    # (T,)
    embeds = jnp.einsum("t,bth->bh", w, task_reprs.astype(jnp.float32))
    pooled = embeds @ pooler_w.astype(jnp.float32).T + pooler_b.astype(jnp.float32)
    norm = jnp.sqrt(jnp.sum(pooled * pooled, axis=-1, keepdims=True))
    return pooled / jnp.maximum(norm, 1e-12)


if __name__ == "__main__":
    key = jax.random.PRNGKey(0)
    kq, kp, kw, kb, k2, kw2, kb2 = jax.random.split(key, 7)

    # --- Test 1: forward() with module-consistent small shapes --------------
    B, T, H, OUT = 8, 4, 128, 64
    query_task_reprs = jax.random.normal(kq, (B, T, H), dtype=jnp.float32)
    passage_task_reprs = jax.random.normal(kp, (B, T, H), dtype=jnp.float32)
    # Deterministic parameters per __init__:
    #   self.weight = nn.Parameter(torch.Tensor([1.0] * total_task_nums))
    weight = jnp.ones((T,), dtype=jnp.float32)
    #   self.pooler = nn.Linear(hidden_size, out_dimension)
    pooler_w = 0.02 * jax.random.normal(kw, (OUT, H), dtype=jnp.float32)
    pooler_b = 0.01 * jax.random.normal(kb, (OUT,), dtype=jnp.float32)

    q_reps, p_reps = biencoder_forward(query_task_reprs, passage_task_reprs,
                                       weight, pooler_w, pooler_b)
    q_reps = jax.block_until_ready(q_reps)
    p_reps = jax.block_until_ready(p_reps)

    q_ref = _reference_encode(query_task_reprs, weight, pooler_w, pooler_b)
    p_ref = _reference_encode(passage_task_reprs, weight, pooler_w, pooler_b)
    assert q_reps.shape == (B, OUT) and p_reps.shape == (B, OUT)
    assert jnp.allclose(q_reps, q_ref, atol=1e-5, rtol=1e-4)
    assert jnp.allclose(p_reps, p_ref, atol=1e-5, rtol=1e-4)

    # --- Test 2: K-split reduction path + non-aligned batch + no lane pad ---
    B2, T2, H2, OUT2 = 20, 4, 256, 256
    x2 = jax.random.normal(k2, (B2, T2, H2), dtype=jnp.float32)
    w2 = jnp.ones((T2,), dtype=jnp.float32)
    pw2 = 0.02 * jax.random.normal(kw2, (OUT2, H2), dtype=jnp.float32)
    pb2 = 0.01 * jax.random.normal(kb2, (OUT2,), dtype=jnp.float32)
    out2 = jax.block_until_ready(encode(x2, w2, pw2, pb2, _force_tile_k=256))
    ref2 = _reference_encode(x2, w2, pw2, pb2)
    assert out2.shape == (B2, OUT2)
    assert jnp.allclose(out2, ref2, atol=1e-5, rtol=1e-4)

    print("KERNEL_OK")
</pallas_src>

<mosaic_0001>
module attributes {stable_mosaic.version = 11 : i64} {
  func.func @_encode_kernel(%arg0: i32, %arg1: i32, %arg2: memref<8x512xf32, #tpu.memory_space<vmem>>, %arg3: memref<512x128xf32, #tpu.memory_space<vmem>>, %arg4: memref<1x128xf32, #tpu.memory_space<vmem>>, %arg5: memref<8x128xf32, #tpu.memory_space<vmem>>, %arg6: memref<8x128xf32, #tpu.memory_space<vmem>>) attributes {dimension_semantics = [#tpu.dimension_semantics<parallel>, #tpu.dimension_semantics<arbitrary>], iteration_bounds = array<i64: 1, 1>, scalar_prefetch = 0 : i64, scratch_operands = 1 : i64, tpu.core_type = #tpu.core_type<tc>, window_params = [{transform_indices = @transform_0, window_bounds = array<i64: 8, 512>}, {pipeline_mode = #tpu.pipeline_mode<synchronous>, transform_indices = @transform_1, window_bounds = array<i64: 512, 128>}, {pipeline_mode = #tpu.pipeline_mode<synchronous>, transform_indices = @transform_2, window_bounds = array<i64: 1, 128>}, {transform_indices = @transform_3, window_bounds = array<i64: 8, 128>}]} {
    %c0_i32 = arith.constant 0 : i32
    %0 = arith.cmpi eq, %arg1, %c0_i32 : i32
    %1 = arith.extui %0 : i1 to i32
    %c0_i32_0 = arith.constant 0 : i32
    %2 = arith.cmpi ne, %1, %c0_i32_0 : i32
    scf.if %2 {
      %cst_10 = arith.constant 0.000000e+00 : f32
      %12 = vector.broadcast %cst_10 : f32 to vector<8x128xf32>
      %c0_11 = arith.constant 0 : index
      %c0_12 = arith.constant 0 : index
      %13 = vector.load %arg6[%c0_11, %c0_12] : memref<8x128xf32, #tpu.memory_space<vmem>>, vector<8x128xf32>
      tpu.vector_store %arg6[%c0_11, %c0_12], %12 {strides = array<i32>} : memref<8x128xf32, #tpu.memory_space<vmem>>, vector<8x128xf32>,
    } else {
    }
    %c0 = arith.constant 0 : index
    %c0_1 = arith.constant 0 : index
    %3 = vector.load %arg6[%c0, %c0_1] : memref<8x128xf32, #tpu.memory_space<vmem>>, vector<8x128xf32>
    %c0_2 = arith.constant 0 : index
    %c0_3 = arith.constant 0 : index
    %4 = vector.load %arg2[%c0_2, %c0_3] : memref<8x512xf32, #tpu.memory_space<vmem>>, vector<8x512xf32>
    %c0_4 = arith.constant 0 : index
    %c0_5 = arith.constant 0 : index
    %5 = vector.load %arg3[%c0_4, %c0_5] : memref<512x128xf32, #tpu.memory_space<vmem>>, vector<512x128xf32>
    %cst = arith.constant dense<0.000000e+00> : vector<8x128xf32>
    %6 = tpu.matmul %4, %5, %cst {dimension_numbers = #tpu.dot_dimension_numbers<[1], [0], [0], [1], [0, 0, 1, 1], [], []>} : vector<8x512xf32>, vector<512x128xf32>, vector<8x128xf32> -> vector<8x128xf32>
    %7 = arith.addf %3, %6 : vector<8x128xf32>
    %c0_6 = arith.constant 0 : index
    %c0_7 = arith.constant 0 : index
    %8 = vector.load %arg6[%c0_6, %c0_7] : memref<8x128xf32, #tpu.memory_space<vmem>>, vector<8x128xf32>
    tpu.vector_store %arg6[%c0_6, %c0_7], %7 {strides = array<i32>} : memref<8x128xf32, #tpu.memory_space<vmem>>, vector<8x128xf32>,
    %c0_i32_8 = arith.constant 0 : i32
    %9 = arith.cmpi eq, %arg1, %c0_i32_8 : i32
    %10 = arith.extui %9 : i1 to i32
    %c0_i32_9 = arith.constant 0 : i32
    %11 = arith.cmpi ne, %10, %c0_i32_9 : i32
    scf.if %11 {
      %c0_10 = arith.constant 0 : index
      %c0_11 = arith.constant 0 : index
      %12 = vector.load %arg6[%c0_10, %c0_11] : memref<8x128xf32, #tpu.memory_space<vmem>>, vector<8x128xf32>
      %c0_12 = arith.constant 0 : index
      %c0_13 = arith.constant 0 : index
      %13 = vector.load %arg4[%c0_12, %c0_13] : memref<1x128xf32, #tpu.memory_space<vmem>>, vector<1x128xf32>
      %14 = vector.broadcast %13 : vector<1x128xf32> to vector<8x128xf32>
      %15 = arith.addf %12, %14 : vector<8x128xf32>
      %16 = arith.mulf %15, %15 : vector<8x128xf32>
      %cst_14 = arith.constant dense<0.000000e+00> : vector<8xf32>
      %17 = vector.multi_reduction <add>, %16, %cst_14 [1] : vector<8x128xf32> to vector<8xf32>
      %18 = vector.shape_cast %17 : vector<8xf32> to vector<8x1xf32>
      %cst_15 = arith.constant 1.000000e-24 : f32
      %19 = vector.broadcast %cst_15 : f32 to vector<8x1xf32>
      %20 = arith.maximumf %18, %19 : vector<8x1xf32>
      %21 = math.rsqrt %20 : vector<8x1xf32>
      %22 = vector.broadcast %21 : vector<8x1xf32> to vector<8x128xf32>
      %23 = arith.mulf %15, %22 : vector<8x128xf32>
      %c0_16 = arith.constant 0 : index
      %c0_17 = arith.constant 0 : index
      %24 = vector.load %arg5[%c0_16, %c0_17] : memref<8x128xf32, #tpu.memory_space<vmem>>, vector<8x128xf32>
      tpu.vector_store %arg5[%c0_16, %c0_17], %23 {strides = array<i32>} : memref<8x128xf32, #tpu.memory_space<vmem>>, vector<8x128xf32>,
    } else {
    }
    return
  }
  func.func @transform_0(%arg0: i32, %arg1: i32) -> (i32, i32) {
    %c0_i32 = arith.constant 0 : i32
    return %arg0, %arg1 : i32, i32
  }
  func.func @transform_1(%arg0: i32, %arg1: i32) -> (i32, i32) {
    %c0_i32 = arith.constant 0 : i32
    %c0_i32_0 = arith.constant 0 : i32
    return %arg1, %c0_i32 : i32, i32
  }
  func.func @transform_2(%arg0: i32, %arg1: i32) -> (i32, i32) {
    %c0_i32 = arith.constant 0 : i32
    %c0_i32_0 = arith.constant 0 : i32
    %c0_i32_1 = arith.constant 0 : i32
    return %c0_i32, %c0_i32_0 : i32, i32
  }
  func.func @transform_3(%arg0: i32, %arg1: i32) -> (i32, i32) {
    %c0_i32 = arith.constant 0 : i32
    %c0_i32_0 = arith.constant 0 : i32
    return %arg0, %c0_i32 : i32, i32
  }
}

</mosaic_0001>

<llo_original>
// kernel: _encode_jit.1
$region0: #{_encode_jit.1}
  #allocation0 [shape = 'u32[]', space=smem, size = 0x4, offset = 0x4, fixed_abs, tag = 'smem constant byte address 0x4 - core index']
  #allocation1 [shape = 'u32[144,128]{1,0:T(1,128)}', space=vmem, size = 0x12000, scoped, tag = 'internal scratch']
  #allocation2 [shape = 'f32[8,128]{1,0:T(8,128)}', space=vmem, size = 0x1000, scoped, tag = 'scratch operand']
  %s0 = inlined_call_operand.vmem [shape: f32[8,512], index: 0, kind: input, shape index: {}]
  %s1 = inlined_call_operand.vmem [shape: f32[512,128], index: 1, kind: input, shape index: {}]
  %s2 = inlined_call_operand.vmem [shape: f32[1,128], index: 2, kind: input, shape index: {}]
  %s3 = inlined_call_operand.hbm [shape: f32[8,128], index: 3, kind: output, shape index: {}]
  %s4 = sld [smem:[#allocation0]]
  $region30: #{_encode_jit.1} parent=0
    _
  %s6 = ssub.s32 1, %s4
  %s7 = scalar_select 0, %s6, %s4
  $region1: #{_encode_jit.1} parent=0
    #allocation3 [shape = 'u8[4096]{0}', space=vmem, size = 0x1000, scoped, tag = 'output window, operand 0, single buffered']
    #allocation4 [shape = 's32[1]{0}', space=sflag, size = 0x4, scoped, tag = 'scoped memory for _encode_jit.1']
    %8 = vsyncpa [#allocation4], 0
    // Predicated region
    $region2: #{_encode_jit.1} parent=1 // pred_check
      _
    $region3: #{_encode_jit.1} parent=1 // pred_check_branch
      %10 = sbr.rel (0) target = $region5
    $region4: #{_encode_jit.1} parent=1 // pred_region
      _
    $region5: #{_encode_jit.1} parent=1 // pred_fallthru
      _
    // Predicated region
    $region6: #{_encode_jit.1} parent=1 // pred_check
      _
    $region7: #{_encode_jit.1} parent=1 // pred_check_branch
      %12 = sbr.rel (0) target = $region9
    $region8: #{_encode_jit.1} parent=1 // pred_region
      _
    $region9: #{_encode_jit.1} parent=1 // pred_fallthru
      _
    // Predicated region
    $region10: #{_encode_jit.1} parent=1 // pred_check
      _
    $region11: #{_encode_jit.1} parent=1 // pred_check_branch
      %14 = sbr.rel (0) target = $region13
    $region12: #{_encode_jit.1} parent=1 // pred_region
      _
    $region13: #{_encode_jit.1} parent=1 // pred_fallthru
      _
    %p15 = scmp.eq.s32.totalorder 0, 0
    // Predicated region
    $region14: #{_encode_jit.1} parent=1 // pred_check
      %p16 = pneg %p15
    $region15: #{_encode_jit.1} parent=1 // pred_check_branch
      %18 = sbr.rel (%p16) target = $region17
    $region16: #{_encode_jit.1} parent=1 // pred_region
      %19 = vst [vmem:[#allocation2] sm:$0xff] 0.0
    $region17: #{_encode_jit.1} parent=1 // pred_fallthru
      _
    %v20 = vld [vmem:[#allocation2] sm:$0xff]
    %v21 = vld [vmem:[%s0] sm:$0xff]
    %v22 = vld [vmem:[%s0 + $0x8] sm:$0xff]
    %v23 = vld [vmem:[%s0 + $0x10] sm:$0xff]
    %v24 = vld [vmem:[%s0 + $0x18] sm:$0xff]
    %v25 = vld [vmem:[%s1] sm:$0xff]
    %v26 = vld [vmem:[%s1 + $0x8] sm:$0xff]
    %v27 = vld [vmem:[%s1 + $0x10] sm:$0xff]
    %v28 = vld [vmem:[%s1 + $0x18] sm:$0xff]
    %v29 = vld [vmem:[%s1 + $0x20] sm:$0xff]
    %v30 = vld [vmem:[%s1 + $0x28] sm:$0xff]
    %v31 = vld [vmem:[%s1 + $0x30] sm:$0xff]
    %v32 = vld [vmem:[%s1 + $0x38] sm:$0xff]
    %v33 = vld [vmem:[%s1 + $0x40] sm:$0xff]
    %v34 = vld [vmem:[%s1 + $0x48] sm:$0xff]
    %v35 = vld [vmem:[%s1 + $0x50] sm:$0xff]
    %v36 = vld [vmem:[%s1 + $0x58] sm:$0xff]
    %v37 = vld [vmem:[%s1 + $0x60] sm:$0xff]
    %v38 = vld [vmem:[%s1 + $0x68] sm:$0xff]
    %v39 = vld [vmem:[%s1 + $0x70] sm:$0xff]
    %v40 = vld [vmem:[%s1 + $0x78] sm:$0xff]
    %v41 = vld [vmem:[%s1 + $0x80] sm:$0xff]
    %v42 = vld [vmem:[%s1 + $0x88] sm:$0xff]
    %v43 = vld [vmem:[%s1 + $0x90] sm:$0xff]
    %v44 = vld [vmem:[%s1 + $0x98] sm:$0xff]
    %v45 = vld [vmem:[%s1 + $0xa0] sm:$0xff]
    %v46 = vld [vmem:[%s1 + $0xa8] sm:$0xff]
    %v47 = vld [vmem:[%s1 + $0xb0] sm:$0xff]
    %v48 = vld [vmem:[%s1 + $0xb8] sm:$0xff]
    %v49 = vld [vmem:[%s1 + $0xc0] sm:$0xff]
    %v50 = vld [vmem:[%s1 + $0xc8] sm:$0xff]
    %v51 = vld [vmem:[%s1 + $0xd0] sm:$0xff]
    %v52 = vld [vmem:[%s1 + $0xd8] sm:$0xff]
    %v53 = vld [vmem:[%s1 + $0xe0] sm:$0xff]
    %v54 = vld [vmem:[%s1 + $0xe8] sm:$0xff]
    %v55 = vld [vmem:[%s1 + $0xf0] sm:$0xff]
    %v56 = vld [vmem:[%s1 + $0xf8] sm:$0xff]
    %v57 = vld [vmem:[%s1 + $0x100] sm:$0xff]
    %v58 = vld [vmem:[%s1 + $0x108] sm:$0xff]
    %v59 = vld [vmem:[%s1 + $0x110] sm:$0xff]
    %v60 = vld [vmem:[%s1 + $0x118] sm:$0xff]
    %v61 = vld [vmem:[%s1 + $0x120] sm:$0xff]
    %v62 = vld [vmem:[%s1 + $0x128] sm:$0xff]
    %v63 = vld [vmem:[%s1 + $0x130] sm:$0xff]
    %v64 = vld [vmem:[%s1 + $0x138] sm:$0xff]
    %v65 = vld [vmem:[%s1 + $0x140] sm:$0xff]
    %v66 = vld [vmem:[%s1 + $0x148] sm:$0xff]
    %v67 = vld [vmem:[%s1 + $0x150] sm:$0xff]
    %v68 = vld [vmem:[%s1 + $0x158] sm:$0xff]
    %v69 = vld [vmem:[%s1 + $0x160] sm:$0xff]
    %v70 = vld [vmem:[%s1 + $0x168] sm:$0xff]
    %v71 = vld [vmem:[%s1 + $0x170] sm:$0xff]
    %v72 = vld [vmem:[%s1 + $0x178] sm:$0xff]
    %v73 = vld [vmem:[%s1 + $0x180] sm:$0xff]
    %v74 = vld [vmem:[%s1 + $0x188] sm:$0xff]
    %v75 = vld [vmem:[%s1 + $0x190] sm:$0xff]
    %v76 = vld [vmem:[%s1 + $0x198] sm:$0xff]
    %v77 = vld [vmem:[%s1 + $0x1a0] sm:$0xff]
    %v78 = vld [vmem:[%s1 + $0x1a8] sm:$0xff]
    %v79 = vld [vmem:[%s1 + $0x1b0] sm:$0xff]
    %v80 = vld [vmem:[%s1 + $0x1b8] sm:$0xff]
    %v81 = vld [vmem:[%s1 + $0x1c0] sm:$0xff]
    %v82 = vld [vmem:[%s1 + $0x1c8] sm:$0xff]
    %v83 = vld [vmem:[%s1 + $0x1d0] sm:$0xff]
    %v84 = vld [vmem:[%s1 + $0x1d8] sm:$0xff]
    %v85 = vld [vmem:[%s1 + $0x1e0] sm:$0xff]
    %v86 = vld [vmem:[%s1 + $0x1e8] sm:$0xff]
    %v87 = vld [vmem:[%s1 + $0x1f0] sm:$0xff]
    %v88 = vld [vmem:[%s1 + $0x1f8] sm:$0xff]
    %89 = vmatprep.subr.mxu0 0.0
    %90 = vmatpush1.msra.mxu0 %v25
    %91 = vmatprep.subr.mxu0 0.0
    %92 = vmatpush1.msra.mxu0 %v26
    %93 = vmatprep.subr.mxu0 0.0
    %94 = vmatpush1.msra.mxu0 %v27
    %95 = vmatprep.subr.mxu0 0.0
    %96 = vmatpush1.msra.mxu0 %v28
    %97 = vmatprep.subr.mxu0 0.0
    %98 = vmatpush1.msra.mxu0 %v29
    %99 = vmatprep.subr.mxu0 0.0
    %100 = vmatpush1.msra.mxu0 %v30
    %101 = vmatprep.subr.mxu0 0.0
    %102 = vmatpush1.msra.mxu0 %v31
    %103 = vmatprep.subr.mxu0 0.0
    %104 = vmatpush1.msra.mxu0 %v32
    %105 = vmatprep.subr.mxu0 0.0
    %106 = vmatpush1.msra.mxu0 %v33
    %107 = vmatprep.subr.mxu0 0.0
    %108 = vmatpush1.msra.mxu0 %v34
    %109 = vmatprep.subr.mxu0 0.0
    %110 = vmatpush1.msra.mxu0 %v35
    %111 = vmatprep.subr.mxu0 0.0
    %112 = vmatpush1.msra.mxu0 %v36
    %113 = vmatprep.subr.mxu0 0.0
    %114 = vmatpush1.msra.mxu0 %v37
    %115 = vmatprep.subr.mxu0 0.0
    %116 = vmatpush1.msra.mxu0 %v38
    %117 = vmatprep.subr.mxu0 0.0
    %118 = vmatpush1.msra.mxu0 %v39
    %119 = vmatprep.subr.mxu0 0.0
    %120 = vmatpush1.msra.mxu0 %v40
    %121 = vmatprep.subr.mxu0 0.0
    %122 = vmatpush1.msra.mxu0 %v41
    %123 = vmatprep.subr.mxu0 0.0
    %124 = vmatpush1.msra.mxu0 %v42
    %125 = vmatprep.subr.mxu0 0.0
    %126 = vmatpush1.msra.mxu0 %v43
    %127 = vmatprep.subr.mxu0 0.0
    %128 = vmatpush1.msra.mxu0 %v44
    %129 = vmatprep.subr.mxu0 0.0
    %130 = vmatpush1.msra.mxu0 %v45
    %131 = vmatprep.subr.mxu0 0.0
    %132 = vmatpush1.msra.mxu0 %v46
    %133 = vmatprep.subr.mxu0 0.0
    %134 = vmatpush1.msra.mxu0 %v47
    %135 = vmatprep.subr.mxu0 0.0
    %136 = vmatpush1.msra.mxu0 %v48
    %137 = vmatprep.subr.mxu0 0.0
    %138 = vmatpush1.msra.mxu0 %v49
    %139 = vmatprep.subr.mxu0 0.0
    %140 = vmatpush1.msra.mxu0 %v50
    %141 = vmatprep.subr.mxu0 0.0
    %142 = vmatpush1.msra.mxu0 %v51
    %143 = vmatprep.subr.mxu0 0.0
    %144 = vmatpush1.msra.mxu0 %v52
    %145 = vmatprep.subr.mxu0 0.0
    %146 = vmatpush1.msra.mxu0 %v53
    %147 = vmatprep.subr.mxu0 0.0
    %148 = vmatpush1.msra.mxu0 %v54
    %149 = vmatprep.subr.mxu0 0.0
    %150 = vmatpush1.msra.mxu0 %v55
    %151 = vmatprep.subr.mxu0 0.0
    %152 = vmatpush1.msra.mxu0 %v56
    %153 = vmatprep.mubr.f32.mxu0 %v22
    %154 = vmatmul.mubr.f32.gmra.mrb[0].mxu0 %v21
    %v155 = vpop.f32.mrb[0].mxu0
    %v156 = vadd.f32 0.0, %v155
    %v157 = vpop.f32.mrb[0].mxu0
    %158 = vdwg.mxu0
    %159 = vmatprep.subr.mxu0 0.0
    %160 = vmatpush1.msra.mxu0 %v57
    %161 = vmatprep.subr.mxu0 0.0
    %162 = vmatpush1.msra.mxu0 %v58
    %163 = vmatprep.subr.mxu0 0.0
    %164 = vmatpush1.msra.mxu0 %v59
    %165 = vmatprep.subr.mxu0 0.0
    %166 = vmatpush1.msra.mxu0 %v60
    %167 = vmatprep.subr.mxu0 0.0
    %168 = vmatpush1.msra.mxu0 %v61
    %169 = vmatprep.subr.mxu0 0.0
    %170 = vmatpush1.msra.mxu0 %v62
    %171 = vmatprep.subr.mxu0 0.0
    %172 = vmatpush1.msra.mxu0 %v63
    %173 = vmatprep.subr.mxu0 0.0
    %174 = vmatpush1.msra.mxu0 %v64
    %175 = vmatprep.subr.mxu0 0.0
    %176 = vmatpush1.msra.mxu0 %v65
    %177 = vmatprep.subr.mxu0 0.0
    %178 = vmatpush1.msra.mxu0 %v66
    %179 = vmatprep.subr.mxu0 0.0
    %180 = vmatpush1.msra.mxu0 %v67
    %181 = vmatprep.subr.mxu0 0.0
    %182 = vmatpush1.msra.mxu0 %v68
    %183 = vmatprep.subr.mxu0 0.0
    %184 = vmatpush1.msra.mxu0 %v69
    %185 = vmatprep.subr.mxu0 0.0
    %186 = vmatpush1.msra.mxu0 %v70
    %187 = vmatprep.subr.mxu0 0.0
    %188 = vmatpush1.msra.mxu0 %v71
    %189 = vmatprep.subr.mxu0 0.0
    %190 = vmatpush1.msra.mxu0 %v72
    %191 = vmatprep.subr.mxu0 0.0
    %192 = vmatpush1.msra.mxu0 %v73
    %193 = vmatprep.subr.mxu0 0.0
    %194 = vmatpush1.msra.mxu0 %v74
    %195 = vmatprep.subr.mxu0 0.0
    %196 = vmatpush1.msra.mxu0 %v75
    %197 = vmatprep.subr.mxu0 0.0
    %198 = vmatpush1.msra.mxu0 %v76
    %199 = vmatprep.subr.mxu0 0.0
    %200 = vmatpush1.msra.mxu0 %v77
    %201 = vmatprep.subr.mxu0 0.0
    %202 = vmatpush1.msra.mxu0 %v78
    %203 = vmatprep.subr.mxu0 0.0
    %204 = vmatpush1.msra.mxu0 %v79
    %205 = vmatprep.subr.mxu0 0.0
    %206 = vmatpush1.msra.mxu0 %v80
    %207 = vmatprep.subr.mxu0 0.0
    %208 = vmatpush1.msra.mxu0 %v81
    %209 = vmatprep.subr.mxu0 0.0
    %210 = vmatpush1.msra.mxu0 %v82
    %211 = vmatprep.subr.mxu0 0.0
    %212 = vmatpush1.msra.mxu0 %v83
    %213 = vmatprep.subr.mxu0 0.0
    %214 = vmatpush1.msra.mxu0 %v84
    %215 = vmatprep.subr.mxu0 0.0
    %216 = vmatpush1.msra.mxu0 %v85
    %217 = vmatprep.subr.mxu0 0.0
    %218 = vmatpush1.msra.mxu0 %v86
    %219 = vmatprep.subr.mxu0 0.0
    %220 = vmatpush1.msra.mxu0 %v87
    %221 = vmatprep.subr.mxu0 0.0
    %222 = vmatpush1.msra.mxu0 %v88
    %223 = vmatprep.mubr.f32.mxu0 %v24
    %224 = vmatmul.mubr.f32.gmra.mrb[0].mxu0 %v23
    %v225 = vpop.f32.mrb[0].mxu0
    %v226 = vadd.f32 %v156, %v225
    %v227 = vpop.f32.mrb[0].mxu0
    %228 = vdwg.mxu0
    %v229 = vadd.f32 %v20, %v226
    %230 = vst [vmem:[#allocation2] sm:$0xff] %v229
    // Predicated region
    $region18: #{_encode_jit.1} parent=1 // pred_check
      %p231 = pneg %p15
    $region19: #{_encode_jit.1} parent=1 // pred_check_branch
      %233 = sbr.rel (%p231) target = $region21
    $region20: #{_encode_jit.1} parent=1 // pred_region
      %v234 = vld [vmem:[#allocation2] sm:$0xff]
      %v235 = vld [vmem:[%s2] sm:$0x1]
      %v237 = vlaneseq
      %v238 = vshrl.u32 %v237, 7
      %v239 = vsub.s32 0, %v238
      %v240 = vrot.slane %v235, %v239
      %v242 = vadd.f32 %v234, %v240
      %v243 = vmul.f32 %v242, %v242
      %244 = vadd.xlane.f32.xlu0 %v243
      %v245 = vpop.xlane.xlu0 %244
      %v246 = vmax.f32 %v245, 1e-24
      %v247 = vrsqrt.pop %v246
      %v248 = vmul.f32 %v242, %v247
      %249 = vst [vmem:[#allocation3] sm:$0xff] %v248
    $region21: #{_encode_jit.1} parent=1 // pred_fallthru
      _
    // Predicated region
    $region22: #{_encode_jit.1} parent=1 // pred_check
      _
    $region23: #{_encode_jit.1} parent=1 // pred_check_branch
      %251 = sbr.rel (0) target = $region25
    $region24: #{_encode_jit.1} parent=1 // pred_region
      %s253 = ssub.s32 128, 128
      %254 = vsyncadd [#allocation4], %s253
      %s256 = sshll.u32 [#allocation3], 4
      %s257 = int_to_ptr.vmem [resolvable:$true] %s256
      %259 = dma.vmem_to_hbm [thread:$0]  %s257, 128, %s3, [#allocation4]
    $region25: #{_encode_jit.1} parent=1 // pred_fallthru
      _
    // Predicated region
    $region26: #{_encode_jit.1} parent=1 // pred_check
      _
    $region27: #{_encode_jit.1} parent=1 // pred_check_branch
      %261 = sbr.rel (0) target = $region29
    $region28: #{_encode_jit.1} parent=1 // pred_region
      %262 = dma.done [#allocation4], 128
    $region29: #{_encode_jit.1} parent=1 // pred_fallthru
      _
    %263 = vsyncpa [#allocation4], 1

</llo_original>
